<compile_context>
chip_gen: v7x
topology: tpu7x:2x2x1
jax: 0.10.0
libtpu: 0.0.40
codegen_flags: <defaults>
</compile_context>

<pallas_src>
import functools
import math

import jax
import jax.numpy as jnp
from jax.experimental import pallas as pl
from jax.experimental.pallas import tpu as pltpu


def _round_up(x, m):
    return ((x + m - 1) // m) * m


def _log_sigmoid(x):
    # Stable log(sigmoid(x)) = min(x, 0) - log(1 + exp(-|x|)); avoids the
    # log(0) = -inf underflow of log(sigmoid(x)) for large |x|.
    return jnp.minimum(x, 0.0) - jnp.log(1.0 + jnp.exp(-jnp.abs(x)))


def nsloss_kernel(embs_ref, w_ref, out_ref, *, n_valid):
    """One row-block: per-row loss = logsig(+pos_dot) + sum_j logsig(-neg_dot_j)."""
    i = pl.program_id(0)
    block_n = embs_ref.shape[0]
    num_slots = w_ref.shape[0]          # s + 1 (slot 0 = positive)

    embs = embs_ref[...].astype(jnp.float32)              # (block_n, d)

    loss = jnp.zeros((block_n, 1), jnp.float32)
    for j in range(num_slots):                            # small & static: unrolled
        w_j = w_ref[j].astype(jnp.float32)                # (block_n, d)  lane-dense
        score = jnp.sum(embs * w_j, axis=-1, keepdims=True)   # (block_n, 1)
        if j != 0:
            score = -score                                # noise = -weights[negs]
        loss = loss + _log_sigmoid(score)

    # Zero out padded rows so the host-side sum is exact.
    row = i * block_n + jax.lax.broadcasted_iota(jnp.int32, (block_n, 1), 0)
    out_ref[...] = jnp.where(row < n_valid, loss, 0.0)


def nsloss_pallas(embs, w_all, *, block_n=None):
    """embs: (n, d); w_all: (s+1, n, d) with slot 0 = weights[label], rest = weights[negs].

    Returns the scalar loss  -sum(loss_rows) / n.
    """
    n, d = embs.shape
    num_slots = w_all.shape[0]
    assert w_all.shape == (num_slots, n, d)

    if block_n is None:
        # Double-buffered working set per step: (num_slots + 1) streams of
        # (block_n, d) plus the tiny (block_n, 1) output.  Keep it well under
        # every generation's default scoped-VMEM budget (v5e 16 MiB, v7x 32 MiB).
        bytes_per_row = 2 * (num_slots + 1) * d * embs.dtype.itemsize + 2 * 4
        vmem_budget = 8 * 1024 * 1024
        cap = max(8, (vmem_budget // bytes_per_row) // 8 * 8)
        block_n = min(_round_up(n, 8), 1024, cap)
    block_n = max(8, _round_up(block_n, 8))

    n_pad = _round_up(n, block_n)
    if n_pad != n:
        embs = jnp.pad(embs, ((0, n_pad - n), (0, 0)))
        w_all = jnp.pad(w_all, ((0, 0), (0, n_pad - n), (0, 0)))

    grid = (n_pad // block_n,)

    row_losses = pl.pallas_call(
        functools.partial(nsloss_kernel, n_valid=n),
        out_shape=jax.ShapeDtypeStruct((n_pad, 1), jnp.float32),
        grid_spec=pltpu.PrefetchScalarGridSpec(
            num_scalar_prefetch=0,
            grid=grid,
            in_specs=[
                pl.BlockSpec((block_n, d), lambda i: (i, 0)),
                pl.BlockSpec((num_slots, block_n, d), lambda i: (0, i, 0)),
            ],
            out_specs=pl.BlockSpec((block_n, 1), lambda i: (i, 0)),
        ),
        compiler_params=pltpu.CompilerParams(
            # Each block writes its own output slot -> no carried state, so the
            # row axis is truly parallel (v7x can shard it across both TCs).
            dimension_semantics=("parallel",),
            vmem_limit_bytes=32 * 1024 * 1024,
        ),
    )(embs, w_all)

    return -jnp.sum(row_losses) / n


def nsloss_forward(weights, sample_weights, inputs, embs, label, num_sampled, key,
                   *, storage_dtype=jnp.bfloat16):
    """Full NSLoss.forward: sampling + gathers in JAX, hot path in Pallas.

    Gathered operands are stored narrow (bf16) in HBM since the kernel is
    bandwidth bound; the kernel upcasts to f32 for the math.
    """
    n = inputs.shape[0]
    num_nodes = weights.shape[0]

    # torch.multinomial(sample_weights, num_sampled * n, replacement=True)
    # TODO(synk): RNG stream differs from torch.multinomial; the sampling
    # distribution matches but outputs are not bit-comparable to PyTorch.
    probs = sample_weights / jnp.sum(sample_weights)
    negs = jax.random.choice(
        key, num_nodes, shape=(num_sampled, n), replace=True, p=probs
    )

    # Fused index stream: slot 0 = positive label, slots 1..s = negatives.
    idx_all = jnp.concatenate([label[None, :].astype(negs.dtype), negs], axis=0)
    w_all = weights[idx_all]                                   # (s+1, n, d), lane-dense

    return nsloss_pallas(
        embs.astype(storage_dtype), w_all.astype(storage_dtype)
    )


def reference_forward(embs, w_all):
    """Pure-JAX reference of the module math (given the sampled negatives)."""
    n = embs.shape[0]
    w_pos = w_all[0]                                           # (n, d)
    w_neg = w_all[1:]                                          # (s, n, d)
    log_target = jax.nn.log_sigmoid(jnp.sum(embs * w_pos, axis=1))
    neg_scores = -jnp.einsum("snd,nd->sn", w_neg, embs)
    sum_log_sampled = jnp.sum(jax.nn.log_sigmoid(neg_scores), axis=0)
    loss = log_target + sum_log_sampled
    return -jnp.sum(loss) / n


if __name__ == "__main__":
    num_nodes = 64
    num_sampled = 5
    embedding_size = 32
    n = 16  # batch of nodes

    root = jax.random.PRNGKey(0)
    k_w, k_e, k_l, k_neg = jax.random.split(root, 4)

    # Parameter init: weights ~ N(0, 1/sqrt(embedding_size))
    weights = (
        jax.random.normal(k_w, (num_nodes, embedding_size), jnp.float32)
        / math.sqrt(embedding_size)
    )

    # sample_weights: L2-normalized log-rank distribution (as in __init__)
    sw = jnp.array(
        [
            (math.log(k + 2) - math.log(k + 1)) / math.log(num_nodes + 1)
            for k in range(num_nodes)
        ],
        dtype=jnp.float32,
    )
    sample_weights = sw / jnp.linalg.norm(sw)

    # Forward inputs
    inputs = jnp.arange(n, dtype=jnp.int32)                    # only shape[0] is used
    embs = jax.random.normal(k_e, (n, embedding_size), jnp.float32)
    label = jax.random.randint(k_l, (n,), 0, num_nodes, jnp.int32)

    # Sample negatives once so kernel and reference see the same draws.
    probs = sample_weights / jnp.sum(sample_weights)
    negs = jax.random.choice(
        k_neg, num_nodes, shape=(num_sampled, n), replace=True, p=probs
    )
    idx_all = jnp.concatenate([label[None, :].astype(negs.dtype), negs], axis=0)
    w_all = weights[idx_all]                                   # (s+1, n, d)

    # f32 path: strict check against the pure-JAX reference.
    loss = jax.block_until_ready(nsloss_pallas(embs, w_all))
    ref = reference_forward(embs, w_all)
    assert jnp.allclose(loss, ref, rtol=1e-5, atol=1e-5), (loss, ref)

    # bf16-storage path (half the HBM bytes; math still f32 inside the kernel).
    embs_b = embs.astype(jnp.bfloat16)
    w_all_b = w_all.astype(jnp.bfloat16)
    loss_b = jax.block_until_ready(nsloss_pallas(embs_b, w_all_b))
    ref_b = reference_forward(embs_b.astype(jnp.float32), w_all_b.astype(jnp.float32))
    assert jnp.allclose(loss_b, ref_b, rtol=1e-4, atol=1e-4), (loss_b, ref_b)

    # Full forward path (sampling + gathers + bf16 storage + kernel).
    loss_fwd = jax.block_until_ready(
        nsloss_forward(weights, sample_weights, inputs, embs, label, num_sampled, k_neg)
    )

    print("KERNEL_OK")
</pallas_src>

<mosaic_0001>
module attributes {stable_mosaic.version = 11 : i64} {
  func.func @nsloss_kernel(%arg0: i32, %arg1: memref<16x32xf32, #tpu.memory_space<vmem>>, %arg2: memref<6x16x32xf32, #tpu.memory_space<vmem>>, %arg3: memref<16x1xf32, #tpu.memory_space<vmem>>) attributes {dimension_semantics = [#tpu.dimension_semantics<parallel>], iteration_bounds = array<i64: 1>, scalar_prefetch = 0 : i64, scratch_operands = 0 : i64, tpu.core_type = #tpu.core_type<tc>, window_params = [{transform_indices = @transform_0, window_bounds = array<i64: 16, 32>}, {transform_indices = @transform_1, window_bounds = array<i64: 6, 16, 32>}, {transform_indices = @transform_2, window_bounds = array<i64: 16, 1>}]} {
    %c0 = arith.constant 0 : index
    %c0_0 = arith.constant 0 : index
    %0 = vector.load %arg1[%c0, %c0_0] : memref<16x32xf32, #tpu.memory_space<vmem>>, vector<16x32xf32>
    %cst = arith.constant 0.000000e+00 : f32
    %1 = vector.broadcast %cst : f32 to vector<16x1xf32>
    %c0_1 = arith.constant 0 : index
    %c0_2 = arith.constant 0 : index
    %c0_3 = arith.constant 0 : index
    %2 = vector.load %arg2[%c0_1, %c0_2, %c0_3] : memref<6x16x32xf32, #tpu.memory_space<vmem>>, vector<1x16x32xf32>
    %3 = vector.shape_cast %2 : vector<1x16x32xf32> to vector<16x32xf32>
    %4 = arith.mulf %0, %3 : vector<16x32xf32>
    %cst_4 = arith.constant dense<0.000000e+00> : vector<16xf32>
    %5 = vector.multi_reduction <add>, %4, %cst_4 [1] : vector<16x32xf32> to vector<16xf32>
    %6 = vector.shape_cast %5 : vector<16xf32> to vector<16x1xf32>
    %cst_5 = arith.constant 0.000000e+00 : f32
    %7 = vector.broadcast %cst_5 : f32 to vector<16x1xf32>
    %8 = arith.minimumf %6, %7 : vector<16x1xf32>
    %9 = math.absf %6 : vector<16x1xf32>
    %cst_6 = arith.constant 0.000000e+00 : f32
    %10 = vector.broadcast %cst_6 : f32 to vector<16x1xf32>
    %11 = arith.subf %10, %9 : vector<16x1xf32>
    %12 = math.exp %11 : vector<16x1xf32>
    %cst_7 = arith.constant 1.000000e+00 : f32
    %13 = vector.broadcast %cst_7 : f32 to vector<16x1xf32>
    %14 = arith.addf %13, %12 : vector<16x1xf32>
    %15 = math.log %14 : vector<16x1xf32>
    %16 = arith.subf %8, %15 : vector<16x1xf32>
    %17 = arith.addf %1, %16 : vector<16x1xf32>
    %c1 = arith.constant 1 : index
    %c0_8 = arith.constant 0 : index
    %c0_9 = arith.constant 0 : index
    %18 = vector.load %arg2[%c1, %c0_8, %c0_9] : memref<6x16x32xf32, #tpu.memory_space<vmem>>, vector<1x16x32xf32>
    %19 = vector.shape_cast %18 : vector<1x16x32xf32> to vector<16x32xf32>
    %20 = arith.mulf %0, %19 : vector<16x32xf32>
    %cst_10 = arith.constant dense<0.000000e+00> : vector<16xf32>
    %21 = vector.multi_reduction <add>, %20, %cst_10 [1] : vector<16x32xf32> to vector<16xf32>
    %22 = vector.shape_cast %21 : vector<16xf32> to vector<16x1xf32>
    %cst_11 = arith.constant 0.000000e+00 : f32
    %23 = vector.broadcast %cst_11 : f32 to vector<16x1xf32>
    %24 = arith.subf %23, %22 : vector<16x1xf32>
    %cst_12 = arith.constant 0.000000e+00 : f32
    %25 = vector.broadcast %cst_12 : f32 to vector<16x1xf32>
    %26 = arith.minimumf %24, %25 : vector<16x1xf32>
    %27 = math.absf %24 : vector<16x1xf32>
    %cst_13 = arith.constant 0.000000e+00 : f32
    %28 = vector.broadcast %cst_13 : f32 to vector<16x1xf32>
    %29 = arith.subf %28, %27 : vector<16x1xf32>
    %30 = math.exp %29 : vector<16x1xf32>
    %cst_14 = arith.constant 1.000000e+00 : f32
    %31 = vector.broadcast %cst_14 : f32 to vector<16x1xf32>
    %32 = arith.addf %31, %30 : vector<16x1xf32>
    %33 = math.log %32 : vector<16x1xf32>
    %34 = arith.subf %26, %33 : vector<16x1xf32>
    %35 = arith.addf %17, %34 : vector<16x1xf32>
    %c2 = arith.constant 2 : index
    %c0_15 = arith.constant 0 : index
    %c0_16 = arith.constant 0 : index
    %36 = vector.load %arg2[%c2, %c0_15, %c0_16] : memref<6x16x32xf32, #tpu.memory_space<vmem>>, vector<1x16x32xf32>
    %37 = vector.shape_cast %36 : vector<1x16x32xf32> to vector<16x32xf32>
    %38 = arith.mulf %0, %37 : vector<16x32xf32>
    %cst_17 = arith.constant dense<0.000000e+00> : vector<16xf32>
    %39 = vector.multi_reduction <add>, %38, %cst_17 [1] : vector<16x32xf32> to vector<16xf32>
    %40 = vector.shape_cast %39 : vector<16xf32> to vector<16x1xf32>
    %cst_18 = arith.constant 0.000000e+00 : f32
    %41 = vector.broadcast %cst_18 : f32 to vector<16x1xf32>
    %42 = arith.subf %41, %40 : vector<16x1xf32>
    %cst_19 = arith.constant 0.000000e+00 : f32
    %43 = vector.broadcast %cst_19 : f32 to vector<16x1xf32>
    %44 = arith.minimumf %42, %43 : vector<16x1xf32>
    %45 = math.absf %42 : vector<16x1xf32>
    %cst_20 = arith.constant 0.000000e+00 : f32
    %46 = vector.broadcast %cst_20 : f32 to vector<16x1xf32>
    %47 = arith.subf %46, %45 : vector<16x1xf32>
    %48 = math.exp %47 : vector<16x1xf32>
    %cst_21 = arith.constant 1.000000e+00 : f32
    %49 = vector.broadcast %cst_21 : f32 to vector<16x1xf32>
    %50 = arith.addf %49, %48 : vector<16x1xf32>
    %51 = math.log %50 : vector<16x1xf32>
    %52 = arith.subf %44, %51 : vector<16x1xf32>
    %53 = arith.addf %35, %52 : vector<16x1xf32>
    %c3 = arith.constant 3 : index
    %c0_22 = arith.constant 0 : index
    %c0_23 = arith.constant 0 : index
    %54 = vector.load %arg2[%c3, %c0_22, %c0_23] : memref<6x16x32xf32, #tpu.memory_space<vmem>>, vector<1x16x32xf32>
    %55 = vector.shape_cast %54 : vector<1x16x32xf32> to vector<16x32xf32>
    %56 = arith.mulf %0, %55 : vector<16x32xf32>
    %cst_24 = arith.constant dense<0.000000e+00> : vector<16xf32>
    %57 = vector.multi_reduction <add>, %56, %cst_24 [1] : vector<16x32xf32> to vector<16xf32>
    %58 = vector.shape_cast %57 : vector<16xf32> to vector<16x1xf32>
    %cst_25 = arith.constant 0.000000e+00 : f32
    %59 = vector.broadcast %cst_25 : f32 to vector<16x1xf32>
    %60 = arith.subf %59, %58 : vector<16x1xf32>
    %cst_26 = arith.constant 0.000000e+00 : f32
    %61 = vector.broadcast %cst_26 : f32 to vector<16x1xf32>
    %62 = arith.minimumf %60, %61 : vector<16x1xf32>
    %63 = math.absf %60 : vector<16x1xf32>
    %cst_27 = arith.constant 0.000000e+00 : f32
    %64 = vector.broadcast %cst_27 : f32 to vector<16x1xf32>
    %65 = arith.subf %64, %63 : vector<16x1xf32>
    %66 = math.exp %65 : vector<16x1xf32>
    %cst_28 = arith.constant 1.000000e+00 : f32
    %67 = vector.broadcast %cst_28 : f32 to vector<16x1xf32>
    %68 = arith.addf %67, %66 : vector<16x1xf32>
    %69 = math.log %68 : vector<16x1xf32>
    %70 = arith.subf %62, %69 : vector<16x1xf32>
    %71 = arith.addf %53, %70 : vector<16x1xf32>
    %c4 = arith.constant 4 : index
    %c0_29 = arith.constant 0 : index
    %c0_30 = arith.constant 0 : index
    %72 = vector.load %arg2[%c4, %c0_29, %c0_30] : memref<6x16x32xf32, #tpu.memory_space<vmem>>, vector<1x16x32xf32>
    %73 = vector.shape_cast %72 : vector<1x16x32xf32> to vector<16x32xf32>
    %74 = arith.mulf %0, %73 : vector<16x32xf32>
    %cst_31 = arith.constant dense<0.000000e+00> : vector<16xf32>
    %75 = vector.multi_reduction <add>, %74, %cst_31 [1] : vector<16x32xf32> to vector<16xf32>
    %76 = vector.shape_cast %75 : vector<16xf32> to vector<16x1xf32>
    %cst_32 = arith.constant 0.000000e+00 : f32
    %77 = vector.broadcast %cst_32 : f32 to vector<16x1xf32>
    %78 = arith.subf %77, %76 : vector<16x1xf32>
    %cst_33 = arith.constant 0.000000e+00 : f32
    %79 = vector.broadcast %cst_33 : f32 to vector<16x1xf32>
    %80 = arith.minimumf %78, %79 : vector<16x1xf32>
    %81 = math.absf %78 : vector<16x1xf32>
    %cst_34 = arith.constant 0.000000e+00 : f32
    %82 = vector.broadcast %cst_34 : f32 to vector<16x1xf32>
    %83 = arith.subf %82, %81 : vector<16x1xf32>
    %84 = math.exp %83 : vector<16x1xf32>
    %cst_35 = arith.constant 1.000000e+00 : f32
    %85 = vector.broadcast %cst_35 : f32 to vector<16x1xf32>
    %86 = arith.addf %85, %84 : vector<16x1xf32>
    %87 = math.log %86 : vector<16x1xf32>
    %88 = arith.subf %80, %87 : vector<16x1xf32>
    %89 = arith.addf %71, %88 : vector<16x1xf32>
    %c5 = arith.constant 5 : index
    %c0_36 = arith.constant 0 : index
    %c0_37 = arith.constant 0 : index
    %90 = vector.load %arg2[%c5, %c0_36, %c0_37] : memref<6x16x32xf32, #tpu.memory_space<vmem>>, vector<1x16x32xf32>
    %91 = vector.shape_cast %90 : vector<1x16x32xf32> to vector<16x32xf32>
    %92 = arith.mulf %0, %91 : vector<16x32xf32>
    %cst_38 = arith.constant dense<0.000000e+00> : vector<16xf32>
    %93 = vector.multi_reduction <add>, %92, %cst_38 [1] : vector<16x32xf32> to vector<16xf32>
    %94 = vector.shape_cast %93 : vector<16xf32> to vector<16x1xf32>
    %cst_39 = arith.constant 0.000000e+00 : f32
    %95 = vector.broadcast %cst_39 : f32 to vector<16x1xf32>
    %96 = arith.subf %95, %94 : vector<16x1xf32>
    %cst_40 = arith.constant 0.000000e+00 : f32
    %97 = vector.broadcast %cst_40 : f32 to vector<16x1xf32>
    %98 = arith.minimumf %96, %97 : vector<16x1xf32>
    %99 = math.absf %96 : vector<16x1xf32>
    %cst_41 = arith.constant 0.000000e+00 : f32
    %100 = vector.broadcast %cst_41 : f32 to vector<16x1xf32>
    %101 = arith.subf %100, %99 : vector<16x1xf32>
    %102 = math.exp %101 : vector<16x1xf32>
    %cst_42 = arith.constant 1.000000e+00 : f32
    %103 = vector.broadcast %cst_42 : f32 to vector<16x1xf32>
    %104 = arith.addf %103, %102 : vector<16x1xf32>
    %105 = math.log %104 : vector<16x1xf32>
    %106 = arith.subf %98, %105 : vector<16x1xf32>
    %107 = arith.addf %89, %106 : vector<16x1xf32>
    %c16_i32 = arith.constant 16 : i32
    %108 = arith.muli %arg0, %c16_i32 : i32
    %109 = tpu.iota {dimensions = array<i32: 0>} : vector<16x1xi32>
    %110 = vector.broadcast %108 : i32 to vector<16x1xi32>
    %111 = arith.addi %110, %109 : vector<16x1xi32>
    %c16_i32_43 = arith.constant 16 : i32
    %112 = vector.broadcast %c16_i32_43 : i32 to vector<16x1xi32>
    %113 = arith.cmpi slt, %111, %112 : vector<16x1xi32>
    %cst_44 = arith.constant 0.000000e+00 : f32
    %114 = vector.broadcast %cst_44 : f32 to vector<16x1xf32>
    %115 = arith.select %113, %107, %114 : vector<16x1xi1>, vector<16x1xf32>
    %c0_45 = arith.constant 0 : index
    %c0_46 = arith.constant 0 : index
    %116 = vector.load %arg3[%c0_45, %c0_46] : memref<16x1xf32, #tpu.memory_space<vmem>>, vector<16x1xf32>
    tpu.vector_store %arg3[%c0_45, %c0_46], %115 {strides = array<i32>} : memref<16x1xf32, #tpu.memory_space<vmem>>, vector<16x1xf32>,
    return
  }
  func.func @transform_0(%arg0: i32) -> (i32, i32) {
    %c0_i32 = arith.constant 0 : i32
    %c0_i32_0 = arith.constant 0 : i32
    return %arg0, %c0_i32 : i32, i32
  }
  func.func @transform_1(%arg0: i32) -> (i32, i32, i32) {
    %c0_i32 = arith.constant 0 : i32
    %c0_i32_0 = arith.constant 0 : i32
    %c0_i32_1 = arith.constant 0 : i32
    return %c0_i32, %arg0, %c0_i32_0 : i32, i32, i32
  }
  func.func @transform_2(%arg0: i32) -> (i32, i32) {
    %c0_i32 = arith.constant 0 : i32
    %c0_i32_0 = arith.constant 0 : i32
    return %arg0, %c0_i32 : i32, i32
  }
}

</mosaic_0001>

<llo_original>
// kernel: tpu_custom_call.1
$region0: #{tpu_custom_call.1}
  #allocation0 [shape = 'u32[]', space=smem, size = 0x4, offset = 0x4, fixed_abs, tag = 'smem constant byte address 0x4 - core index']
  #allocation1 [shape = 'u32[144,128]{1,0:T(1,128)}', space=vmem, size = 0x12000, scoped, tag = 'internal scratch']
  %s0 = inlined_call_operand.hbm [shape: f32[16,32], index: 0, kind: input, shape index: {}]
  %s1 = inlined_call_operand.hbm [shape: f32[6,16,32], index: 1, kind: input, shape index: {}]
  %s2 = inlined_call_operand.vmem [shape: f32[16,1], index: 2, kind: output, shape index: {}]
  %s3 = sld [smem:[#allocation0]]
  $region26: #{tpu_custom_call.1} parent=0
    _
  %s5 = ssub.s32 1, %s3
  %s6 = scalar_select 0, %s5, %s3
  $region1: #{tpu_custom_call.1} parent=0
    #allocation2 [shape = 'u8[8192]{0}', space=vmem, size = 0x2000, scoped, tag = 'input window, operand 0, single buffered']
    #allocation3 [shape = 's32[1]{0}', space=sflag, size = 0x4, scoped, tag = 'scoped memory for tpu_custom_call.1']
    #allocation4 [shape = 'u8[49152]{0}', space=vmem, size = 0xc000, scoped, tag = 'input window, operand 1, single buffered']
    #allocation5 [shape = 's32[1]{0}', space=sflag, size = 0x4, scoped, tag = 'scoped memory for tpu_custom_call.1']
    %7 = vsyncpa [#allocation3], 0
    %8 = vsyncpa [#allocation5], 0
    // Predicated region
    $region2: #{tpu_custom_call.1} parent=1 // pred_check
      _
    $region3: #{tpu_custom_call.1} parent=1 // pred_check_branch
      %10 = sbr.rel (0) target = $region5
    $region4: #{tpu_custom_call.1} parent=1 // pred_region
      %s12 = ssub.s32 256, 256
      %13 = vsyncadd [#allocation3], %s12
      %s14 = sshll.u32 [#allocation2], 4
      %s15 = int_to_ptr.vmem [resolvable:$true] %s14
      %20 = dma.hbm_to_vmem [thread:$0]  %s0, 256, %s15, [#allocation3], 128, 128, 8
    $region5: #{tpu_custom_call.1} parent=1 // pred_fallthru
      _
    // Predicated region
    $region6: #{tpu_custom_call.1} parent=1 // pred_check
      _
    $region7: #{tpu_custom_call.1} parent=1 // pred_check_branch
      %22 = sbr.rel (0) target = $region9
    $region8: #{tpu_custom_call.1} parent=1 // pred_region
      %s24 = ssub.s32 1536, 1536
      %25 = vsyncadd [#allocation5], %s24
      %s26 = sshll.u32 [#allocation4], 4
      %s27 = int_to_ptr.vmem [resolvable:$true] %s26
      %32 = dma.hbm_to_vmem [thread:$0]  %s1, 1536, %s27, [#allocation5], 128, 128, 8
    $region9: #{tpu_custom_call.1} parent=1 // pred_fallthru
      _
    // Predicated region
    $region10: #{tpu_custom_call.1} parent=1 // pred_check
      _
    $region11: #{tpu_custom_call.1} parent=1 // pred_check_branch
      %34 = sbr.rel (0) target = $region13
    $region12: #{tpu_custom_call.1} parent=1 // pred_region
      %35 = dma.done [#allocation3], 256
    $region13: #{tpu_custom_call.1} parent=1 // pred_fallthru
      _
    // Predicated region
    $region14: #{tpu_custom_call.1} parent=1 // pred_check
      _
    $region15: #{tpu_custom_call.1} parent=1 // pred_check_branch
      %37 = sbr.rel (0) target = $region17
    $region16: #{tpu_custom_call.1} parent=1 // pred_region
      %38 = dma.done [#allocation5], 1536
    $region17: #{tpu_custom_call.1} parent=1 // pred_fallthru
      _
    %v39 = vld [vmem:[#allocation2] sm:$0xff]
    %v40 = vld [vmem:[#allocation2 + $0x8] sm:$0xff]
    %v41 = vld [vmem:[#allocation4] sm:$0xff]
    %v42 = vld [vmem:[#allocation4 + $0x8] sm:$0xff]
    %v43 = vmul.f32 %v39, %v41
    %v44 = vmul.f32 %v40, %v42
    %vm45 = vcmask 261120
    %v46 = vsel %vm45, %v43, 0.0
    %47 = vadd.xlane.f32.xlu0 %v46
    %v48 = vpop.xlane.xlu0 %47
    %v49 = vsel %vm45, %v44, 0.0
    %50 = vadd.xlane.f32.xlu0 %v49
    %v51 = vpop.xlane.xlu0 %50
    %v52 = vmin.f32 %v48, 0.0
    %v53 = vmin.f32 %v51, 0.0
    %v54 = vand.u32 2147483647, %v48
    %v55 = vand.u32 2147483647, %v51
    %v56 = vsub.f32 0.0, %v54
    %v57 = vsub.f32 0.0, %v55
    %v58 = vmul.f32 %v56, 1.442695
    %v59 = vpow.pop %v58
    %v60 = vmul.f32 %v57, 1.442695
    %v61 = vpow.pop %v60
    %v62 = vadd.f32 %v59, 1.0
    %v63 = vadd.f32 %v61, 1.0
    %v64 = vlog2.pop %v62
    %v65 = vmul.f32 %v64, 0.6931472
    %v66 = vlog2.pop %v63
    %v67 = vmul.f32 %v66, 0.6931472
    %v68 = vsub.f32 %v52, %v65
    %v69 = vsub.f32 %v53, %v67
    %v70 = vadd.f32 %v68, 0.0
    %v71 = vadd.f32 %v69, 0.0
    %s72 = scalar_lea.vmem [#allocation4], 16
    %v73 = vld [vmem:[%s72] sm:$0xff]
    %v74 = vld [vmem:[%s72 + $0x8] sm:$0xff]
    %v75 = vmul.f32 %v39, %v73
    %v76 = vmul.f32 %v40, %v74
    %v77 = vsel %vm45, %v75, 0.0
    %78 = vadd.xlane.f32.xlu0 %v77
    %v79 = vpop.xlane.xlu0 %78
    %v80 = vsel %vm45, %v76, 0.0
    %81 = vadd.xlane.f32.xlu0 %v80
    %v82 = vpop.xlane.xlu0 %81
    %v83 = vsub.f32 0.0, %v79
    %v84 = vsub.f32 0.0, %v82
    %v85 = vmin.f32 %v83, 0.0
    %v86 = vmin.f32 %v84, 0.0
    %v87 = vand.u32 2147483647, %v83
    %v88 = vand.u32 2147483647, %v84
    %v89 = vsub.f32 0.0, %v87
    %v90 = vsub.f32 0.0, %v88
    %v91 = vmul.f32 %v89, 1.442695
    %v92 = vpow.pop %v91
    %v93 = vmul.f32 %v90, 1.442695
    %v94 = vpow.pop %v93
    %v95 = vadd.f32 %v92, 1.0
    %v96 = vadd.f32 %v94, 1.0
    %v97 = vlog2.pop %v95
    %v98 = vmul.f32 %v97, 0.6931472
    %v99 = vlog2.pop %v96
    %v100 = vmul.f32 %v99, 0.6931472
    %v101 = vsub.f32 %v85, %v98
    %v102 = vsub.f32 %v86, %v100
    %v103 = vadd.f32 %v70, %v101
    %v104 = vadd.f32 %v71, %v102
    %s105 = scalar_lea.vmem [#allocation4], 32
    %v106 = vld [vmem:[%s105] sm:$0xff]
    %v107 = vld [vmem:[%s105 + $0x8] sm:$0xff]
    %v108 = vmul.f32 %v39, %v106
    %v109 = vmul.f32 %v40, %v107
    %v110 = vsel %vm45, %v108, 0.0
    %111 = vadd.xlane.f32.xlu0 %v110
    %v112 = vpop.xlane.xlu0 %111
    %v113 = vsel %vm45, %v109, 0.0
    %114 = vadd.xlane.f32.xlu0 %v113
    %v115 = vpop.xlane.xlu0 %114
    %v116 = vsub.f32 0.0, %v112
    %v117 = vsub.f32 0.0, %v115
    %v118 = vmin.f32 %v116, 0.0
    %v119 = vmin.f32 %v117, 0.0
    %v120 = vand.u32 2147483647, %v116
    %v121 = vand.u32 2147483647, %v117
    %v122 = vsub.f32 0.0, %v120
    %v123 = vsub.f32 0.0, %v121
    %v124 = vmul.f32 %v122, 1.442695
    %v125 = vpow.pop %v124
    %v126 = vmul.f32 %v123, 1.442695
    %v127 = vpow.pop %v126
    %v128 = vadd.f32 %v125, 1.0
    %v129 = vadd.f32 %v127, 1.0
    %v130 = vlog2.pop %v128
    %v131 = vmul.f32 %v130, 0.6931472
    %v132 = vlog2.pop %v129
    %v133 = vmul.f32 %v132, 0.6931472
    %v134 = vsub.f32 %v118, %v131
    %v135 = vsub.f32 %v119, %v133
    %v136 = vadd.f32 %v103, %v134
    %v137 = vadd.f32 %v104, %v135
    %s138 = scalar_lea.vmem [#allocation4], 48
    %v139 = vld [vmem:[%s138] sm:$0xff]
    %v140 = vld [vmem:[%s138 + $0x8] sm:$0xff]
    %v141 = vmul.f32 %v39, %v139
    %v142 = vmul.f32 %v40, %v140
    %v143 = vsel %vm45, %v141, 0.0
    %144 = vadd.xlane.f32.xlu0 %v143
    %v145 = vpop.xlane.xlu0 %144
    %v146 = vsel %vm45, %v142, 0.0
    %147 = vadd.xlane.f32.xlu0 %v146
    %v148 = vpop.xlane.xlu0 %147
    %v149 = vsub.f32 0.0, %v145
    %v150 = vsub.f32 0.0, %v148
    %v151 = vmin.f32 %v149, 0.0
    %v152 = vmin.f32 %v150, 0.0
    %v153 = vand.u32 2147483647, %v149
    %v154 = vand.u32 2147483647, %v150
    %v155 = vsub.f32 0.0, %v153
    %v156 = vsub.f32 0.0, %v154
    %v157 = vmul.f32 %v155, 1.442695
    %v158 = vpow.pop %v157
    %v159 = vmul.f32 %v156, 1.442695
    %v160 = vpow.pop %v159
    %v161 = vadd.f32 %v158, 1.0
    %v162 = vadd.f32 %v160, 1.0
    %v163 = vlog2.pop %v161
    %v164 = vmul.f32 %v163, 0.6931472
    %v165 = vlog2.pop %v162
    %v166 = vmul.f32 %v165, 0.6931472
    %v167 = vsub.f32 %v151, %v164
    %v168 = vsub.f32 %v152, %v166
    %v169 = vadd.f32 %v136, %v167
    %v170 = vadd.f32 %v137, %v168
    %s171 = scalar_lea.vmem [#allocation4], 64
    %v172 = vld [vmem:[%s171] sm:$0xff]
    %v173 = vld [vmem:[%s171 + $0x8] sm:$0xff]
    %v174 = vmul.f32 %v39, %v172
    %v175 = vmul.f32 %v40, %v173
    %v176 = vsel %vm45, %v174, 0.0
    %177 = vadd.xlane.f32.xlu0 %v176
    %v178 = vpop.xlane.xlu0 %177
    %v179 = vsel %vm45, %v175, 0.0
    %180 = vadd.xlane.f32.xlu0 %v179
    %v181 = vpop.xlane.xlu0 %180
    %v182 = vsub.f32 0.0, %v178
    %v183 = vsub.f32 0.0, %v181
    %v184 = vmin.f32 %v182, 0.0
    %v185 = vmin.f32 %v183, 0.0
    %v186 = vand.u32 2147483647, %v182
    %v187 = vand.u32 2147483647, %v183
    %v188 = vsub.f32 0.0, %v186
    %v189 = vsub.f32 0.0, %v187
    %v190 = vmul.f32 %v188, 1.442695
    %v191 = vpow.pop %v190
    %v192 = vmul.f32 %v189, 1.442695
    %v193 = vpow.pop %v192
    %v194 = vadd.f32 %v191, 1.0
    %v195 = vadd.f32 %v193, 1.0
    %v196 = vlog2.pop %v194
    %v197 = vmul.f32 %v196, 0.6931472
    %v198 = vlog2.pop %v195
    %v199 = vmul.f32 %v198, 0.6931472
    %v200 = vsub.f32 %v184, %v197
    %v201 = vsub.f32 %v185, %v199
    %v202 = vadd.f32 %v169, %v200
    %v203 = vadd.f32 %v170, %v201
    %s204 = scalar_lea.vmem [#allocation4], 80
    %v205 = vld [vmem:[%s204] sm:$0xff]
    %v206 = vld [vmem:[%s204 + $0x8] sm:$0xff]
    %v207 = vmul.f32 %v39, %v205
    %v208 = vmul.f32 %v40, %v206
    %v209 = vsel %vm45, %v207, 0.0
    %210 = vadd.xlane.f32.xlu0 %v209
    %v211 = vpop.xlane.xlu0 %210
    %v212 = vsel %vm45, %v208, 0.0
    %213 = vadd.xlane.f32.xlu0 %v212
    %v214 = vpop.xlane.xlu0 %213
    %v215 = vsub.f32 0.0, %v211
    %v216 = vsub.f32 0.0, %v214
    %v217 = vmin.f32 %v215, 0.0
    %v218 = vmin.f32 %v216, 0.0
    %v219 = vand.u32 2147483647, %v215
    %v220 = vand.u32 2147483647, %v216
    %v221 = vsub.f32 0.0, %v219
    %v222 = vsub.f32 0.0, %v220
    %v223 = vmul.f32 %v221, 1.442695
    %v224 = vpow.pop %v223
    %v225 = vmul.f32 %v222, 1.442695
    %v226 = vpow.pop %v225
    %v227 = vadd.f32 %v224, 1.0
    %v228 = vadd.f32 %v226, 1.0
    %v229 = vlog2.pop %v227
    %v230 = vmul.f32 %v229, 0.6931472
    %v231 = vlog2.pop %v228
    %v232 = vmul.f32 %v231, 0.6931472
    %v233 = vsub.f32 %v217, %v230
    %v234 = vsub.f32 %v218, %v232
    %v235 = vadd.f32 %v202, %v233
    %v236 = vadd.f32 %v203, %v234
    %s237 = smul.u32 0, 16
    %v238 = vlaneseq
    %v239 = vshrl.u32 %v238, 7
    %v240 = vadd.s32 %v239, 8
    %v241 = vstv %s237
    %v242 = vadd.s32 %v241, %v239
    %v243 = vadd.s32 %v241, %v240
    %vm244 = vcmp.lt.s32.totalorder %v242, 16
    %vm245 = vcmp.lt.s32.totalorder %v243, 16
    %v246 = vsel %vm244, %v235, 0.0
    %v247 = vsel %vm245, %v236, 0.0
    %vm248 = vcmask 7168
    %249 = vst.msk [vmem:[%s2] sm:$0xff] %vm248, %v246
    %250 = vst.msk [vmem:[%s2 + $0x8] sm:$0xff] %vm248, %v247
    // Predicated region
    $region18: #{tpu_custom_call.1} parent=1 // pred_check
      _
    $region19: #{tpu_custom_call.1} parent=1 // pred_check_branch
      %252 = sbr.rel (0) target = $region21
    $region20: #{tpu_custom_call.1} parent=1 // pred_region
      _
    $region21: #{tpu_custom_call.1} parent=1 // pred_fallthru
      _
    // Predicated region
    $region22: #{tpu_custom_call.1} parent=1 // pred_check
      _
    $region23: #{tpu_custom_call.1} parent=1 // pred_check_branch
      %254 = sbr.rel (0) target = $region25
    $region24: #{tpu_custom_call.1} parent=1 // pred_region
      _
    $region25: #{tpu_custom_call.1} parent=1 // pred_fallthru
      _
    %255 = vsyncpa [#allocation3], 1
    %256 = vsyncpa [#allocation5], 1

</llo_original>
